<compile_context>
chip_gen: v5e
topology: v5e:2x2
jax: 0.10.0
libtpu: 0.0.40
codegen_flags: <defaults>
</compile_context>

<pallas_src>
import jax
import jax.numpy as jnp
from jax.experimental import pallas as pl
from jax.experimental.pallas import tpu as pltpu


def se_block_kernel(x_ref, w1t_ref, w2t_ref, o_ref):
    # x_ref:   (TB, C, L) tile of the input (current batch block)
    # w1t_ref: (C, Cr)  = W1.T   (resident across the whole grid)
    # w2t_ref: (Cr, C)  = W2.T
    x = x_ref[...]                                                # (TB, C, L)
    inv_l = 1.0 / x.shape[-1]                                     # static Python float

    # squeeze: mean over L, accumulated in float32 (XLU reduce, no f32 tile copy)
    y = jnp.sum(x, axis=-1, dtype=jnp.float32) * inv_l            # (TB, C) f32

    # excite: Linear -> ReLU -> Linear -> Sigmoid (MXU + EUP; negligible vs stream)
    h = jnp.dot(y, w1t_ref[...], preferred_element_type=jnp.float32)   # (TB, Cr)
    h = jnp.maximum(h, 0.0)
    s = jnp.dot(h, w2t_ref[...], preferred_element_type=jnp.float32)   # (TB, C)
    s = jax.nn.sigmoid(s)

    # scale: broadcast the per-channel gate over L in the input dtype
    o_ref[...] = (x * s.astype(x.dtype)[:, :, None]).astype(o_ref.dtype)


def _choose_tb(B, C, L, itemsize, pipeline_budget_bytes):
    """Largest batch tile s.t. 2 streamed arrays x 2 pipeline buffers fit the budget."""
    per_row = C * L * itemsize
    tb = pipeline_budget_bytes // (4 * per_row)
    tb = max(1, min(int(tb), B))
    if B >= 2:
        # Keep at least 2 grid steps so a 2-TensorCore chip (v7x) can split
        # the "parallel" batch axis across cores.
        tb = min(tb, -(-B // 2))
    return tb


def se_block(x, w1, w2, *, vmem_pipeline_budget_bytes=36 * 1024 * 1024):
    """x: (B, C, L); w1: (Cr, C) = first Linear weight; w2: (C, Cr) = second."""
    B, C, L = x.shape
    Cr = w1.shape[0]
    assert w1.shape == (Cr, C) and w2.shape == (C, Cr)

    # Pre-transpose the weights once (outside the grid loop) so the in-kernel
    # dots contract in the natural K-on-lanes layout with no per-step XLU work.
    w1t = jnp.asarray(w1).T      # (C, Cr)
    w2t = jnp.asarray(w2).T      # (Cr, C)

    itemsize = jnp.dtype(x.dtype).itemsize
    tb = _choose_tb(B, C, L, itemsize, vmem_pipeline_budget_bytes)

    num_blocks = pl.cdiv(B, tb)
    b_pad = num_blocks * tb
    x_in = x if b_pad == B else jnp.pad(x, ((0, b_pad - B), (0, 0), (0, 0)))

    w_bytes = (w1.size + w2.size) * jnp.dtype(w1.dtype).itemsize
    cost = pl.CostEstimate(
        flops=4 * b_pad * C * Cr + 3 * b_pad * C * L,
        transcendentals=b_pad * C,
        bytes_accessed=2 * b_pad * C * L * itemsize + w_bytes,
    )

    out = pl.pallas_call(
        se_block_kernel,
        out_shape=jax.ShapeDtypeStruct((b_pad, C, L), x.dtype),
        grid_spec=pltpu.PrefetchScalarGridSpec(
            num_scalar_prefetch=0,
            grid=(num_blocks,),
            in_specs=[
                pl.BlockSpec((tb, C, L), lambda b: (b, 0, 0)),   # x: batch block
                pl.BlockSpec((C, Cr), lambda b: (0, 0)),         # W1.T: resident
                pl.BlockSpec((Cr, C), lambda b: (0, 0)),         # W2.T: resident
            ],
            out_specs=pl.BlockSpec((tb, C, L), lambda b: (b, 0, 0)),
        ),
        compiler_params=pltpu.CompilerParams(
            dimension_semantics=("parallel",),
            vmem_limit_bytes=48 * 1024 * 1024,
        ),
        cost_estimate=cost,
    )(x_in, w1t, w2t)

    return out[:B] if b_pad != B else out


def se_block_ref(x, w1, w2):
    y = jnp.mean(x, axis=-1)
    h = jnp.maximum(y @ w1.T, 0.0)
    s = jax.nn.sigmoid(h @ w2.T)
    return x * s[:, :, None]


if __name__ == "__main__":
    B, C, L = 2, 32, 16
    reduction = 16
    Cr = C // reduction  # 2

    key = jax.random.PRNGKey(0)
    kx, k1, k2 = jax.random.split(key, 3)

    x = jax.random.normal(kx, (B, C, L), dtype=jnp.float32)
    # deterministic synthetic weights matching nn.Linear shapes (out, in), no bias
    w1 = jax.random.normal(k1, (Cr, C), dtype=jnp.float32) * 0.1
    w2 = jax.random.normal(k2, (C, Cr), dtype=jnp.float32) * 0.1

    out = jax.block_until_ready(se_block(x, w1, w2))

    ref = se_block_ref(x, w1, w2)
    assert out.shape == (B, C, L)
    assert jnp.allclose(out, ref, atol=1e-5, rtol=1e-5), "mismatch vs reference"

    print("KERNEL_OK")
</pallas_src>

<mosaic_0001>
module attributes {stable_mosaic.version = 11 : i64} {
  func.func @se_block_kernel(%arg0: i32, %arg1: memref<1x32x16xf32, #tpu.memory_space<vmem>>, %arg2: memref<32x2xf32, #tpu.memory_space<vmem>>, %arg3: memref<2x32xf32, #tpu.memory_space<vmem>>, %arg4: memref<1x32x16xf32, #tpu.memory_space<vmem>>) attributes {dimension_semantics = [#tpu.dimension_semantics<parallel>], iteration_bounds = array<i64: 2>, scalar_prefetch = 0 : i64, scratch_operands = 0 : i64, tpu.core_type = #tpu.core_type<tc>, window_params = [{transform_indices = @transform_0, window_bounds = array<i64: 1, 32, 16>}, {pipeline_mode = #tpu.pipeline_mode<synchronous>, transform_indices = @transform_1, window_bounds = array<i64: 32, 2>}, {pipeline_mode = #tpu.pipeline_mode<synchronous>, transform_indices = @transform_2, window_bounds = array<i64: 2, 32>}, {transform_indices = @transform_3, window_bounds = array<i64: 1, 32, 16>}]} {
    %c0 = arith.constant 0 : index
    %c0_0 = arith.constant 0 : index
    %c0_1 = arith.constant 0 : index
    %0 = vector.load %arg1[%c0, %c0_0, %c0_1] : memref<1x32x16xf32, #tpu.memory_space<vmem>>, vector<1x32x16xf32>
    %cst = arith.constant dense<0.000000e+00> : vector<1x32xf32>
    %1 = vector.multi_reduction <add>, %0, %cst [2] : vector<1x32x16xf32> to vector<1x32xf32>
    %cst_2 = arith.constant 6.250000e-02 : f32
    %2 = vector.broadcast %cst_2 : f32 to vector<1x32xf32>
    %3 = arith.mulf %1, %2 : vector<1x32xf32>
    %c0_3 = arith.constant 0 : index
    %c0_4 = arith.constant 0 : index
    %4 = vector.load %arg2[%c0_3, %c0_4] : memref<32x2xf32, #tpu.memory_space<vmem>>, vector<32x2xf32>
    %cst_5 = arith.constant dense<0.000000e+00> : vector<1x2xf32>
    %5 = tpu.matmul %3, %4, %cst_5 {dimension_numbers = #tpu.dot_dimension_numbers<[1], [0], [0], [1], [0, 0, 1, 1], [], []>} : vector<1x32xf32>, vector<32x2xf32>, vector<1x2xf32> -> vector<1x2xf32>
    %cst_6 = arith.constant 0.000000e+00 : f32
    %6 = vector.broadcast %cst_6 : f32 to vector<1x2xf32>
    %7 = arith.maximumf %5, %6 : vector<1x2xf32>
    %c0_7 = arith.constant 0 : index
    %c0_8 = arith.constant 0 : index
    %8 = vector.load %arg3[%c0_7, %c0_8] : memref<2x32xf32, #tpu.memory_space<vmem>>, vector<2x32xf32>
    %cst_9 = arith.constant dense<0.000000e+00> : vector<1x32xf32>
    %9 = tpu.matmul %7, %8, %cst_9 {dimension_numbers = #tpu.dot_dimension_numbers<[1], [0], [0], [1], [0, 0, 1, 1], [], []>} : vector<1x2xf32>, vector<2x32xf32>, vector<1x32xf32> -> vector<1x32xf32>
    %10 = arith.negf %9 : vector<1x32xf32>
    %11 = math.exp %10 : vector<1x32xf32>
    %cst_10 = arith.constant 1.000000e+00 : f32
    %12 = vector.broadcast %cst_10 : f32 to vector<1x32xf32>
    %13 = arith.addf %12, %11 : vector<1x32xf32>
    %14 = arith.divf %12, %13 : vector<1x32xf32>
    %15 = vector.shape_cast %14 : vector<1x32xf32> to vector<1x32x1xf32>
    %16 = vector.broadcast %15 : vector<1x32x1xf32> to vector<1x32x16xf32>
    %17 = arith.mulf %0, %16 : vector<1x32x16xf32>
    %c0_11 = arith.constant 0 : index
    %c0_12 = arith.constant 0 : index
    %c0_13 = arith.constant 0 : index
    %18 = vector.load %arg4[%c0_11, %c0_12, %c0_13] : memref<1x32x16xf32, #tpu.memory_space<vmem>>, vector<1x32x16xf32>
    tpu.vector_store %arg4[%c0_11, %c0_12, %c0_13], %17 {strides = array<i32>} : memref<1x32x16xf32, #tpu.memory_space<vmem>>, vector<1x32x16xf32>,
    return
  }
  func.func @transform_0(%arg0: i32) -> (i32, i32, i32) {
    %c0_i32 = arith.constant 0 : i32
    %c0_i32_0 = arith.constant 0 : i32
    %c0_i32_1 = arith.constant 0 : i32
    return %arg0, %c0_i32, %c0_i32_0 : i32, i32, i32
  }
  func.func @transform_1(%arg0: i32) -> (i32, i32) {
    %c0_i32 = arith.constant 0 : i32
    %c0_i32_0 = arith.constant 0 : i32
    %c0_i32_1 = arith.constant 0 : i32
    return %c0_i32, %c0_i32_0 : i32, i32
  }
  func.func @transform_2(%arg0: i32) -> (i32, i32) {
    %c0_i32 = arith.constant 0 : i32
    %c0_i32_0 = arith.constant 0 : i32
    %c0_i32_1 = arith.constant 0 : i32
    return %c0_i32, %c0_i32_0 : i32, i32
  }
  func.func @transform_3(%arg0: i32) -> (i32, i32, i32) {
    %c0_i32 = arith.constant 0 : i32
    %c0_i32_0 = arith.constant 0 : i32
    %c0_i32_1 = arith.constant 0 : i32
    return %arg0, %c0_i32, %c0_i32_0 : i32, i32, i32
  }
}

</mosaic_0001>

<llo_original>
// kernel: tpu_custom_call.1
$region0: #{tpu_custom_call.1}
  #allocation0 [shape = 'u32[]', space=smem, size = 0x4, offset = 0x4, fixed_abs, tag = 'smem constant byte address 0x4 - core index']
  #allocation1 [shape = 'u32[72,128]{1,0:T(1,128)}', space=vmem, size = 0x9000, scoped, tag = 'internal scratch']
  %s0 = inlined_call_operand.vmem [shape: f32[2,32,16], index: 0, kind: input, shape index: {}]
  %s1 = inlined_call_operand.vmem [shape: f32[32,2], index: 1, kind: input, shape index: {}]
  %s2 = inlined_call_operand.vmem [shape: f32[2,32], index: 2, kind: input, shape index: {}]
  %s3 = inlined_call_operand.vmem [shape: f32[2,32,16], index: 3, kind: output, shape index: {}]
  %s4 = sld [smem:[#allocation0]]
  $region45: #{tpu_custom_call.1} parent=0
    _
  %s6 = ssub.s32 1, %s4
  %s7 = scalar_select 0, %s6, %s4
  loop: start=0, step=1, limit=4
  $region2: #{tpu_custom_call.1} parent=0 // loop_pre_header
    _
  $region3: #{tpu_custom_call.1} parent=0 // loop_header
    %s9 = sphi 0, %s13
    %p10 = scmp.ge.s32.totalorder %s9, 4
    %s19 = sphi 0, %s21
    %s22 = sphi 0, %s19
    %s23 = sphi 0, %s22
    %s39 = sphi 0, %s23
    %s43 = sphi 0, %s43
    %s45 = sphi 0, %s43
    %s46 = sphi 0, %s45
    %s60 = sphi 0, %s46
    %s64 = sphi 0, %s64
    %s66 = sphi 0, %s64
    %s67 = sphi 0, %s66
    %s81 = sphi 0, %s67
    %s87 = sphi 0, %s89
    %s90 = sphi 0, %s87
    %s91 = sphi 0, %s90
    %s107 = sphi 0, %s91
  $region4: #{tpu_custom_call.1} parent=0 // loop_header_branch
    %12 = sbr.rel (%p10) target = $region8
  $region5: #{tpu_custom_call.1} parent=0 // loop_body
    %s14 = ssub.s32 %s9, 1
    %s15 = ssub.s32 %s9, 2
    %s16 = sadd.s32 %s9, 1
    %s17 = ssub.s32 %s9, %s16
    %p18 = scmp.eq.s32.totalorder %s17, 0
    %s20 = sadd.s32 %s19, 1
    %s21 = scalar_select %p18, %s19, %s20
    %p24 = pneg %p18
    %p25 = scmp.eq.s32.totalorder %s9, 1
    %p26 = por %p24, %p25
    %p27 = scmp.ne.s32.totalorder %s19, %s22
    %p28 = scmp.eq.s32.totalorder %s9, 0
    %p29 = por %p27, %p28
    %p30 = scmp.ne.s32.totalorder %s19, %s22
    %p31 = scmp.eq.s32.totalorder %s14, 1
    %p32 = por %p30, %p31
    %p33 = scmp.ne.s32.totalorder %s22, %s23
    %p34 = scmp.eq.s32.totalorder %s14, 0
    %p35 = por %p33, %p34
    %p36 = scmp.ne.s32.totalorder %s22, %s23
    %p37 = scmp.eq.s32.totalorder %s15, 1
    %p38 = por %p36, %p37
    %p40 = scmp.ne.s32.totalorder %s23, %s39
    %p41 = scmp.eq.s32.totalorder %s15, 0
    %p42 = por %p40, %p41
    %s44 = sadd.s32 %s43, 1
    %p47 = scmp.eq.s32.totalorder %s9, 1
    %p48 = scmp.ne.s32.totalorder %s43, %s45
    %p49 = scmp.eq.s32.totalorder %s9, 0
    %p50 = por %p48, %p49
    %p51 = scmp.ne.s32.totalorder %s43, %s45
    %p52 = scmp.eq.s32.totalorder %s14, 1
    %p53 = por %p51, %p52
    %p54 = scmp.ne.s32.totalorder %s45, %s46
    %p55 = scmp.eq.s32.totalorder %s14, 0
    %p56 = por %p54, %p55
    %p57 = scmp.ne.s32.totalorder %s45, %s46
    %p58 = scmp.eq.s32.totalorder %s15, 1
    %p59 = por %p57, %p58
    %p61 = scmp.ne.s32.totalorder %s46, %s60
    %p62 = scmp.eq.s32.totalorder %s15, 0
    %p63 = por %p61, %p62
    %s65 = sadd.s32 %s64, 1
    %p68 = scmp.eq.s32.totalorder %s9, 1
    %p69 = scmp.ne.s32.totalorder %s64, %s66
    %p70 = scmp.eq.s32.totalorder %s9, 0
    %p71 = por %p69, %p70
    %p72 = scmp.ne.s32.totalorder %s64, %s66
    %p73 = scmp.eq.s32.totalorder %s14, 1
    %p74 = por %p72, %p73
    %p75 = scmp.ne.s32.totalorder %s66, %s67
    %p76 = scmp.eq.s32.totalorder %s14, 0
    %p77 = por %p75, %p76
    %p78 = scmp.ne.s32.totalorder %s66, %s67
    %p79 = scmp.eq.s32.totalorder %s15, 1
    %p80 = por %p78, %p79
    %p82 = scmp.ne.s32.totalorder %s67, %s81
    %p83 = scmp.eq.s32.totalorder %s15, 0
    %p84 = por %p82, %p83
    %s85 = ssub.s32 %s9, %s16
    %p86 = scmp.eq.s32.totalorder %s85, 0
    %s88 = sadd.s32 %s87, 1
    %s89 = scalar_select %p86, %s87, %s88
    %p92 = pneg %p86
    %p93 = scmp.eq.s32.totalorder %s9, 1
    %p94 = por %p92, %p93
    %p95 = scmp.ne.s32.totalorder %s87, %s90
    %p96 = scmp.eq.s32.totalorder %s9, 0
    %p97 = por %p95, %p96
    %p98 = scmp.ne.s32.totalorder %s87, %s90
    %p99 = scmp.eq.s32.totalorder %s14, 1
    %p100 = por %p98, %p99
    %p101 = scmp.ne.s32.totalorder %s90, %s91
    %p102 = scmp.eq.s32.totalorder %s14, 0
    %p103 = por %p101, %p102
    %p104 = scmp.ne.s32.totalorder %s90, %s91
    %p105 = scmp.eq.s32.totalorder %s15, 1
    %p106 = por %p104, %p105
    %p108 = scmp.ne.s32.totalorder %s91, %s107
    %p109 = scmp.eq.s32.totalorder %s15, 0
    %p110 = por %p108, %p109
    %p111 = scmp.le.s32.totalorder 1, %s9
    %p112 = scmp.lt.s32.totalorder %s9, 3
    %p113 = pnand %p111, %p112
    %p114 = pneg %p113
    // Predicated region
    $region9: #{tpu_custom_call.1} parent=5 // pred_check
      _
    $region10: #{tpu_custom_call.1} parent=5 // pred_check_branch
      %116 = sbr.rel (%p113) target = $region12
    $region11: #{tpu_custom_call.1} parent=5 // pred_region
      %s117 = ssub.s32 %s9, 1
      // Predicated region
      $region13: #{tpu_custom_call.1} parent=11 // pred_check
        %p118 = pneg %p56
      $region14: #{tpu_custom_call.1} parent=11 // pred_check_branch
        %120 = sbr.rel (%p118) target = $region16
      $region15: #{tpu_custom_call.1} parent=11 // pred_region
        _
      $region16: #{tpu_custom_call.1} parent=11 // pred_fallthru
        _
      // Predicated region
      $region17: #{tpu_custom_call.1} parent=11 // pred_check
        %p121 = pneg %p77
      $region18: #{tpu_custom_call.1} parent=11 // pred_check_branch
        %123 = sbr.rel (%p121) target = $region20
      $region19: #{tpu_custom_call.1} parent=11 // pred_region
        _
      $region20: #{tpu_custom_call.1} parent=11 // pred_fallthru
        _
    $region12: #{tpu_custom_call.1} parent=5 // pred_fallthru
      _
    %p124 = scmp.lt.s32.totalorder %s9, 2
    // Predicated region
    $region21: #{tpu_custom_call.1} parent=5 // pred_check
      %p125 = pneg %p124
    $region22: #{tpu_custom_call.1} parent=5 // pred_check_branch
      %127 = sbr.rel (%p125) target = $region24
    $region23: #{tpu_custom_call.1} parent=5 // pred_region
      // Predicated region
      $region25: #{tpu_custom_call.1} parent=23 // pred_check
        %p128 = pneg %p29
      $region26: #{tpu_custom_call.1} parent=23 // pred_check_branch
        %130 = sbr.rel (%p128) target = $region28
      $region27: #{tpu_custom_call.1} parent=23 // pred_region
        %p131 = scmp.lt.s32.totalorder %s9, 1
        %s132 = scalar_select %p131, %s9, 1
        %s133 = smul.addr %s132, 4
        %s134 = smul.addr %s133, 8
        %s135 = scalar_lea.vmem %s0, %s134
      $region28: #{tpu_custom_call.1} parent=23 // pred_fallthru
        _
    $region24: #{tpu_custom_call.1} parent=5 // pred_fallthru
      _
    %p136 = scmp.le.s32.totalorder 1, %s9
    %p137 = scmp.lt.s32.totalorder %s9, 3
    %p138 = pnand %p136, %p137
    %p139 = pneg %p138
    // Predicated region
    $region29: #{tpu_custom_call.1} parent=5 // pred_check
      _
    $region30: #{tpu_custom_call.1} parent=5 // pred_check_branch
      %141 = sbr.rel (%p138) target = $region32
    $region31: #{tpu_custom_call.1} parent=5 // pred_region
      %s142 = ssub.s32 %s9, 1
      %p143 = scmp.lt.s32.totalorder %s14, 1
      %s144 = scalar_select %p143, %s14, 1
      %s145 = smul.addr %s144, 4
      %s146 = smul.addr %s145, 8
      %s147 = scalar_lea.vmem %s0, %s146
      %p148 = pneg %p35
      %p149 = pneg %p32
      %p150 = pneg %p56
      %p151 = pneg %p53
      %p152 = pneg %p77
      %p153 = pneg %p74
      %p154 = pneg %p103
      %p155 = pneg %p100
      %p156 = scmp.lt.s32.totalorder %s14, 1
      %s157 = scalar_select %p156, %s14, 1
      %s158 = smul.addr %s157, 4
      %s159 = smul.addr %s158, 8
      %s160 = scalar_lea.vmem %s3, %s159
      %p161 = scmp.lt.s32.totalorder %s14, 1
      %s162 = scalar_select %p161, %s14, 1
      %s163 = smul.addr %s162, 4
      %s164 = smul.addr %s163, 8
      %s165 = scalar_lea.vmem %s0, %s164
      %p166 = scmp.lt.s32.totalorder %s14, 1
      %s167 = scalar_select %p166, %s14, 1
      %s168 = smul.addr %s167, 4
      %s169 = smul.addr %s168, 8
      %s170 = scalar_lea.vmem %s3, %s169
      %v171 = vld [vmem:[%s165] sm:$0xff]
      %v172 = vld [vmem:[%s165 + $0x8] sm:$0xff]
      %v173 = vld [vmem:[%s165 + $0x10] sm:$0xff]
      %v174 = vld [vmem:[%s165 + $0x18] sm:$0xff]
      %vm175 = vcmask 130048
      %v176 = vsel %vm175, %v171, 0.0
      %177 = vadd.xlane.f32.xlu0 %v176
      %v178 = vpop.xlane.xlu0 %177
      %v179 = vsel %vm175, %v172, 0.0
      %180 = vadd.xlane.f32.xlu0 %v179
      %v181 = vpop.xlane.xlu0 %180
      %v182 = vsel %vm175, %v173, 0.0
      %183 = vadd.xlane.f32.xlu0 %v182
      %v184 = vpop.xlane.xlu0 %183
      %v185 = vsel %vm175, %v174, 0.0
      %186 = vadd.xlane.f32.xlu0 %v185
      %v187 = vpop.xlane.xlu0 %186
      %v188 = vmul.f32 %v178, 0.0625
      %v189 = vmul.f32 %v181, 0.0625
      %v190 = vmul.f32 %v184, 0.0625
      %v191 = vmul.f32 %v187, 0.0625
      %v192 = vld [vmem:[%s1] sm:$0xff]
      %v193 = vld [vmem:[%s1 + $0x8] sm:$0xff]
      %v194 = vld [vmem:[%s1 + $0x10] sm:$0xff]
      %v195 = vld [vmem:[%s1 + $0x18] sm:$0xff]
      %v200 = vlaneseq
      %v201 = vand.u32 %v200, 127
      %v202 = vperm.slane %v188, %v201
      %v203 = vadd.s32 %v201, 4294967288
      %v204 = vperm.slane %v189, %v203
      %vm205 = vcmask 130112
      %v206 = vsel %vm205, %v204, %v202
      %v207 = vadd.s32 %v201, 4294967280
      %v208 = vperm.slane %v190, %v207
      %vm209 = vcmask 195712
      %v210 = vsel %vm209, %v208, %v206
      %v211 = vadd.s32 %v201, 4294967272
      %v212 = vperm.slane %v191, %v211
      %vm213 = vcmask 261312
      %v214 = vsel %vm213, %v212, %v210
      %vm215 = vcmask 261120
      %v216 = vsel %vm215, %v214, 0
      %218 = vmatpush.msra.mxu0 0.0
      %219 = vmatpush.msra.mxu0 0.0
      %220 = vmatpush.msra.mxu0 0.0
      %221 = vmatpush.msra.mxu0 0.0
      %222 = vmatpush.msra.mxu0 0.0
      %223 = vmatpush.msra.mxu0 0.0
      %224 = vmatpush.msra.mxu0 0.0
      %225 = vmatpush.msra.mxu0 0.0
      %226 = vmatpush.msra.mxu0 0.0
      %227 = vmatpush.msra.mxu0 0.0
      %228 = vmatpush.msra.mxu0 0.0
      %229 = vmatpush.msra.mxu0 0.0
      %230 = vmatpush.msra.mxu0 %v195
      %231 = vmatpush.msra.mxu0 %v194
      %232 = vmatpush.msra.mxu0 %v193
      %233 = vmatpush.msra.mxu0 %v192
      %234 = vmatmul.f32.gmra.mxu0 %v216
      %v235 = vpop.f32.mrf.mxu0
      %v236 = vadd.f32 0.0, %v235
      %237 = vdwg.mxu0
      %v238 = vmax.f32 %v236, 0.0
      %v239 = vld [vmem:[%s2] sm:$0x3]
      %vm240 = vcmask 15360
      %v242 = vsel %vm240, %v238, 0
      %vm244 = vcmask 1041408
      %v246 = vsel %vm244, %v239, 0
      %248 = vmatpush.msra.mxu0 0.0
      %249 = vmatpush.msra.mxu0 0.0
      %250 = vmatpush.msra.mxu0 0.0
      %251 = vmatpush.msra.mxu0 0.0
      %252 = vmatpush.msra.mxu0 0.0
      %253 = vmatpush.msra.mxu0 0.0
      %254 = vmatpush.msra.mxu0 0.0
      %255 = vmatpush.msra.mxu0 0.0
      %256 = vmatpush.msra.mxu0 0.0
      %257 = vmatpush.msra.mxu0 0.0
      %258 = vmatpush.msra.mxu0 0.0
      %259 = vmatpush.msra.mxu0 0.0
      %260 = vmatpush.msra.mxu0 0.0
      %261 = vmatpush.msra.mxu0 0.0
      %262 = vmatpush.msra.mxu0 0.0
      %263 = vmatpush.msra.mxu0 %v246
      %264 = vmatmul.f32.gmra.mxu0 %v242
      %v265 = vpop.f32.mrf.mxu0
      %v266 = vadd.f32 0.0, %v265
      %267 = vdwg.mxu0
      %v268 = vxor.u32 %v266, 2147483648
      %v269 = vmul.f32 %v268, 1.442695
      %v270 = vpow.pop %v269
      %v271 = vadd.f32 %v270, 1.0
      %v272 = vrcp.pop %v271
      %v273 = vmul.f32 %v271, %v272
      %v274 = vsub.f32 1.0, %v273
      %v275 = vmul.f32 %v272, %v274
      %v276 = vadd.f32 %v272, %v275
      %vm277 = vweird.f32 %v271
      %vm278 = vweird.f32 %v272
      %vm279 = vmor %vm277, %vm278
      %v280 = vsel %vm279, %v272, %v276
      %v281 = vand.u32 2147483647, %v271
      %vm282 = vcmp.eq.f32.partialorder %v281, 8.507059e+37
      %v283 = vand.u32 %v271, 2147483648
      %v284 = vor.u32 1.1754944e-38, %v283
      %v285 = vsel %vm282, %v284, %v280
      %v286 = vmul.f32 1.0, %v285
      %v287 = vperm.slane %v286, 0
      %v288 = vlaneseq
      %v289 = vshrl.u32 %v288, 7
      %291 = vset.pattern.permute.xlu0 %v289
      %292 = vperm.xlu0 %291, %v287
      %v293 = vpop.permute.xlu0 %292
      %v294 = vlaneseq
      %v295 = vshrl.u32 %v294, 7
      %v296 = vadd.s32 %v295, 8
      %297 = vset.pattern.permute.xlu0 %v296
      %298 = vperm.xlu0 %297, %v287
      %v299 = vpop.permute.xlu0 %298
      %v300 = vlaneseq
      %v301 = vshrl.u32 %v300, 7
      %v302 = vadd.s32 %v301, 16
      %303 = vset.pattern.permute.xlu0 %v302
      %304 = vperm.xlu0 %303, %v287
      %v305 = vpop.permute.xlu0 %304
      %v306 = vlaneseq
      %v307 = vshrl.u32 %v306, 7
      %v308 = vadd.s32 %v307, 24
      %309 = vset.pattern.permute.xlu0 %v308
      %310 = vperm.xlu0 %309, %v287
      %v311 = vpop.permute.xlu0 %310
      %v312 = vmul.f32 %v171, %v293
      %v313 = vmul.f32 %v172, %v299
      %v314 = vmul.f32 %v173, %v305
      %v315 = vmul.f32 %v174, %v311
      %316 = vst.msk [vmem:[%s170] sm:$0xff] %vm175, %v312
      %317 = vst.msk [vmem:[%s170 + $0x8] sm:$0xff] %vm175, %v313
      %318 = vst.msk [vmem:[%s170 + $0x10] sm:$0xff] %vm175, %v314
      %319 = vst.msk [vmem:[%s170 + $0x18] sm:$0xff] %vm175, %v315
      %p320 = scmp.lt.s32.totalorder %s14, 1
      %s321 = scalar_select %p320, %s14, 1
      %s322 = smul.addr %s321, 4
      %s323 = smul.addr %s322, 8
      %s324 = scalar_lea.vmem %s3, %s323
      // Predicated region
      $region33: #{tpu_custom_call.1} parent=31 // pred_check
        %p325 = pneg %p100
      $region34: #{tpu_custom_call.1} parent=31 // pred_check_branch
        %327 = sbr.rel (%p325) target = $region36
      $region35: #{tpu_custom_call.1} parent=31 // pred_region
        _
      $region36: #{tpu_custom_call.1} parent=31 // pred_fallthru
        _
    $region32: #{tpu_custom_call.1} parent=5 // pred_fallthru
      _
    %p328 = scmp.le.s32.totalorder 2, %s9
    // Predicated region
    $region37: #{tpu_custom_call.1} parent=5 // pred_check
      %p329 = pneg %p328
    $region38: #{tpu_custom_call.1} parent=5 // pred_check_branch
      %331 = sbr.rel (%p329) target = $region40
    $region39: #{tpu_custom_call.1} parent=5 // pred_region
      %s332 = ssub.s32 %s9, 2
      // Predicated region
      $region41: #{tpu_custom_call.1} parent=39 // pred_check
        %p333 = pneg %p106
      $region42: #{tpu_custom_call.1} parent=39 // pred_check_branch
        %335 = sbr.rel (%p333) target = $region44
      $region43: #{tpu_custom_call.1} parent=39 // pred_region
        %p336 = scmp.lt.s32.totalorder %s15, 1
        %s337 = scalar_select %p336, %s15, 1
        %s338 = smul.addr %s337, 4
        %s339 = smul.addr %s338, 8
        %s340 = scalar_lea.vmem %s3, %s339
      $region44: #{tpu_custom_call.1} parent=39 // pred_fallthru
        _
    $region40: #{tpu_custom_call.1} parent=5 // pred_fallthru
      _
  $region6: #{tpu_custom_call.1} parent=0 // loop_footer
    %s13 = sadd.s32 1, %s9
  $region7: #{tpu_custom_call.1} parent=0 // loop_footer_branch
    %8 = sbr.rel target = $region3
  $region8: #{tpu_custom_call.1} parent=0 // loop_exit
    _

</llo_original>
